<compile_context>
chip_gen: v6e
topology: v6e:2x2x1
jax: 0.10.0
libtpu: 0.0.40
codegen_flags: <defaults>
</compile_context>

<pallas_src>
import jax
import jax.numpy as jnp
from jax.experimental import pallas as pl
from jax.experimental.pallas import tpu as pltpu


def _rec_kernel(uid_ref, pid_ref, ut_ref, pt_ref, b_ref, o_ref):
    """Fused gather + interaction + Linear(E,1) for one lane-dense batch tile.

    Layout: embedding dim E on sublanes, batch on lanes.
      uid_ref, pid_ref : (1, TB) int32 VMEM   ids for this batch tile
      ut_ref           : (E, U)  f32   VMEM   user table, pre-scaled by fc weight, transposed
      pt_ref           : (E, P)  f32   VMEM   product embedding table (transposed)
      b_ref            : (1, 1)  f32   SMEM   fc bias
      o_ref            : (1, TB) f32   VMEM   scores for this tile (lane-dense)
    """
    tb = uid_ref.shape[1]
    num_users = ut_ref.shape[1]
    num_products = pt_ref.shape[1]

    u_ids = uid_ref[...]                                    # (1, TB) int32
    p_ids = pid_ref[...]                                    # (1, TB) int32

    # In-kernel gather via one-hot matmul. The kernel is memory-bound, so the otherwise-idle
    # MXU does the gather "for free" (max-not-sum). precision=HIGHEST keeps the f32 gather
    # bit-exact (default precision may run bf16 passes on the table operand).
    u_rows = jax.lax.broadcasted_iota(jnp.int32, (num_users, tb), 0)
    p_rows = jax.lax.broadcasted_iota(jnp.int32, (num_products, tb), 0)
    oh_u = (u_rows == u_ids).astype(jnp.float32)            # (U, TB)
    oh_p = (p_rows == p_ids).astype(jnp.float32)            # (P, TB)

    u_g = jnp.dot(ut_ref[...], oh_u,
                  precision=jax.lax.Precision.HIGHEST,
                  preferred_element_type=jnp.float32)       # (E, TB), already fc_w-scaled
    p_g = jnp.dot(pt_ref[...], oh_p,
                  precision=jax.lax.Precision.HIGHEST,
                  preferred_element_type=jnp.float32)       # (E, TB)

    # interaction (already weighted via the folded fc_w), reduced over E on the VPU/XLU.
    o_ref[...] = (jnp.sum(u_g * p_g, axis=0, keepdims=True)
                  + b_ref[0, 0]).astype(o_ref.dtype)


def prepare_params(params):
    """One-time, table-sized prep (do NOT call per forward).

    - transposes both tables to the lane-dense [E, rows] layout the kernel wants,
    - folds fc_w into the user table (u_t_scaled = (user_emb * fc_w).T), removing one
      (E, TB) multiply and an (E,1)->(E,TB) broadcast per tile inside the kernel.
    Tables stay f32 here so the gather + reference stay bit-identical; on v6e/v7x they
    could be stored bf16 (with f32 accumulate) to halve table VMEM.
    """
    user_emb = params["user_emb"]                  # [U, E]
    prod_emb = params["prod_emb"]                  # [P, E]
    fc_w = params["fc_w"]                          # [E, 1]
    return {
        "u_t_scaled": (user_emb * fc_w[:, 0]).T,   # [E, U]
        "p_t": prod_emb.T,                         # [E, P]
        "fc_b": params["fc_b"].reshape(1, 1),      # (1, 1) scalar for SMEM
    }


def _pick_batch_tile(b_pad128):
    """Lane-dense batch tile (multiple of 128).

    Per-sample HBM traffic is ~12 B (2 int32 ids + 1 f32 score), so big tiles are needed to
    amortize the ~0.35 us per-grid-step overhead; but keep >= 2 tiles when possible so v7x's
    two TensorCores can split the "parallel" batch axis, and cap at 1024 lanes so the
    (U+P, TB) one-hot intermediates stay modest.
    """
    if b_pad128 <= 128:
        return 128
    half = ((b_pad128 // 2 + 127) // 128) * 128
    return min(1024, half)


def recommendation_forward(user_ids, product_ids, prepped, *, batch_tile=None):
    """Pallas-backed forward pass of RecommendationModel.

    user_ids, product_ids: int [B]
    prepped: output of prepare_params()
    returns: float32 [B] for B > 1, 0-d scalar for B == 1 (matches torch .squeeze()).
    """
    u_t = prepped["u_t_scaled"]                    # [E, U]
    p_t = prepped["p_t"]                           # [E, P]
    fc_b = prepped["fc_b"]                         # (1, 1)

    E, U = u_t.shape
    _, P = p_t.shape
    B = user_ids.shape[0]

    b_pad128 = pl.cdiv(B, 128) * 128
    tb = batch_tile if batch_tile is not None else _pick_batch_tile(b_pad128)
    n_tiles = pl.cdiv(B, tb)
    b_pad = n_tiles * tb

    # Pad the tail tile with row 0 (valid index); padded lanes are sliced off below.
    uid = jnp.pad(user_ids.astype(jnp.int32), (0, b_pad - B)).reshape(1, b_pad)
    pid = jnp.pad(product_ids.astype(jnp.int32), (0, b_pad - B)).reshape(1, b_pad)

    # Explicit scoped-VMEM budget: single-buffered tables + one-hot temporaries +
    # double-buffered id/output tiles + headroom. v5e's default is only 16 MiB.
    table_bytes = (U + P) * E * 4                     # tables, single-buffered
    onehot_bytes = (U + P) * tb * 4                   # (U,TB)+(P,TB) f32 intermediates
    tile_bytes = 3 * tb * 4 * 2                       # 2 id tiles + 1 out tile, double-buffered
    vmem_limit = int(max(32 << 20,
                         min(2 * (table_bytes + onehot_bytes) + tile_bytes + (8 << 20),
                             64 << 20)))

    out = pl.pallas_call(
        _rec_kernel,
        out_shape=jax.ShapeDtypeStruct((1, b_pad), jnp.float32),
        grid_spec=pltpu.PrefetchScalarGridSpec(
            num_scalar_prefetch=0,
            grid=(n_tiles,),
            in_specs=[
                pl.BlockSpec((1, tb), lambda i: (0, i)),             # user ids tile
                pl.BlockSpec((1, tb), lambda i: (0, i)),             # product ids tile
                # Grid-invariant, VMEM-resident tables: single-buffer them (index_map is
                # constant, so double-buffering would only waste VMEM).
                pl.BlockSpec((E, U), lambda i: (0, 0),
                             pipeline_mode=pl.Buffered(1)),           # user table (scaled)
                pl.BlockSpec((E, P), lambda i: (0, 0),
                             pipeline_mode=pl.Buffered(1)),           # product table
                pl.BlockSpec(memory_space=pltpu.MemorySpace.SMEM),    # fc bias scalar
            ],
            out_specs=pl.BlockSpec((1, tb), lambda i: (0, i)),        # lane-dense output
        ),
        compiler_params=pltpu.CompilerParams(
            dimension_semantics=("parallel",),
            vmem_limit_bytes=vmem_limit),
    )(uid, pid, u_t, p_t, fc_b)

    scores = out[0, :B]                           # drop tail padding
    if B == 1:
        return scores[0]                          # 0-d scalar, matches torch .squeeze()
    return scores


def init_params(key, num_users, num_products, embedding_size):
    """Deterministic synthetic init matching the torch module's parameter shapes."""
    k1, k2, k3, k4 = jax.random.split(key, 4)
    # nn.Embedding default init: N(0, 1)
    user_emb = jax.random.normal(k1, (num_users, embedding_size), jnp.float32)
    prod_emb = jax.random.normal(k2, (num_products, embedding_size), jnp.float32)
    # nn.Linear default init: U(-1/sqrt(E), 1/sqrt(E))
    bound = 1.0 / (embedding_size ** 0.5)
    fc_w = jax.random.uniform(k3, (embedding_size, 1), jnp.float32, -bound, bound)
    fc_b = jax.random.uniform(k4, (1,), jnp.float32, -bound, bound)
    return {"user_emb": user_emb, "prod_emb": prod_emb, "fc_w": fc_w, "fc_b": fc_b}


if __name__ == "__main__":
    num_users = 16
    num_products = 24
    embedding_size = 32
    batch = 8

    key = jax.random.PRNGKey(0)
    pkey, ukey, ikey = jax.random.split(key, 3)
    params = init_params(pkey, num_users, num_products, embedding_size)

    user_ids = jax.random.randint(ukey, (batch,), 0, num_users, dtype=jnp.int32)
    product_ids = jax.random.randint(ikey, (batch,), 0, num_products, dtype=jnp.int32)

    # One-time table prep (hoisted transpose + fc_w fold); reused across forward calls.
    prepped = jax.tree_util.tree_map(jnp.asarray, prepare_params(params))

    out = recommendation_forward(user_ids, product_ids, prepped)
    out = jax.block_until_ready(out)

    # Pure-JAX reference check of the same math (on the ORIGINAL params).
    u = params["user_emb"][user_ids]
    p = params["prod_emb"][product_ids]
    ref = (u * p) @ params["fc_w"][:, 0] + params["fc_b"][0]
    assert out.shape == (batch,)
    assert jnp.allclose(out, ref, atol=1e-4, rtol=1e-5), (out, ref)

    print("KERNEL_OK")
</pallas_src>

<mosaic_0001>
module attributes {stable_mosaic.version = 11 : i64} {
  func.func @_rec_kernel(%arg0: i32, %arg1: memref<1x128xi32, #tpu.memory_space<vmem>>, %arg2: memref<1x128xi32, #tpu.memory_space<vmem>>, %arg3: memref<32x16xf32, #tpu.memory_space<vmem>>, %arg4: memref<32x24xf32, #tpu.memory_space<vmem>>, %arg5: memref<1x1xf32, #tpu.memory_space<smem>>, %arg6: memref<1x128xf32, #tpu.memory_space<vmem>>) attributes {dimension_semantics = [#tpu.dimension_semantics<parallel>], iteration_bounds = array<i64: 1>, scalar_prefetch = 0 : i64, scratch_operands = 0 : i64, tpu.core_type = #tpu.core_type<tc>, window_params = [{transform_indices = @transform_0, window_bounds = array<i64: 1, 128>}, {transform_indices = @transform_1, window_bounds = array<i64: 1, 128>}, {pipeline_mode = #tpu.pipeline_mode<synchronous>, transform_indices = @transform_2, window_bounds = array<i64: 32, 16>}, {pipeline_mode = #tpu.pipeline_mode<synchronous>, transform_indices = @transform_3, window_bounds = array<i64: 32, 24>}, {transform_indices = @transform_4, window_bounds = array<i64: 1, 1>}, {transform_indices = @transform_5, window_bounds = array<i64: 1, 128>}]} {
    %c0 = arith.constant 0 : index
    %c0_0 = arith.constant 0 : index
    %0 = vector.load %arg1[%c0, %c0_0] : memref<1x128xi32, #tpu.memory_space<vmem>>, vector<1x128xi32>
    %c0_1 = arith.constant 0 : index
    %c0_2 = arith.constant 0 : index
    %1 = vector.load %arg2[%c0_1, %c0_2] : memref<1x128xi32, #tpu.memory_space<vmem>>, vector<1x128xi32>
    %2 = tpu.iota {dimensions = array<i32: 0>} : vector<16x128xi32>
    %3 = tpu.iota {dimensions = array<i32: 0>} : vector<24x128xi32>
    %4 = vector.broadcast %0 : vector<1x128xi32> to vector<16x128xi32>
    %5 = arith.cmpi eq, %2, %4 : vector<16x128xi32>
    %6 = arith.extui %5 : vector<16x128xi1> to vector<16x128xi32>
    %7 = arith.sitofp %6 : vector<16x128xi32> to vector<16x128xf32>
    %8 = vector.broadcast %1 : vector<1x128xi32> to vector<24x128xi32>
    %9 = arith.cmpi eq, %3, %8 : vector<24x128xi32>
    %10 = arith.extui %9 : vector<24x128xi1> to vector<24x128xi32>
    %11 = arith.sitofp %10 : vector<24x128xi32> to vector<24x128xf32>
    %c0_3 = arith.constant 0 : index
    %c0_4 = arith.constant 0 : index
    %12 = vector.load %arg3[%c0_3, %c0_4] : memref<32x16xf32, #tpu.memory_space<vmem>>, vector<32x16xf32>
    %cst = arith.constant dense<0.000000e+00> : vector<32x128xf32>
    %13 = tpu.matmul %12, %7, %cst {dimension_numbers = #tpu.dot_dimension_numbers<[1], [0], [0], [1], [0, 0, 1, 1], [], []>, precision = #tpu.contract_precision<fp32>} : vector<32x16xf32>, vector<16x128xf32>, vector<32x128xf32> -> vector<32x128xf32>
    %c0_5 = arith.constant 0 : index
    %c0_6 = arith.constant 0 : index
    %14 = vector.load %arg4[%c0_5, %c0_6] : memref<32x24xf32, #tpu.memory_space<vmem>>, vector<32x24xf32>
    %cst_7 = arith.constant dense<0.000000e+00> : vector<32x128xf32>
    %15 = tpu.matmul %14, %11, %cst_7 {dimension_numbers = #tpu.dot_dimension_numbers<[1], [0], [0], [1], [0, 0, 1, 1], [], []>, precision = #tpu.contract_precision<fp32>} : vector<32x24xf32>, vector<24x128xf32>, vector<32x128xf32> -> vector<32x128xf32>
    %16 = arith.mulf %13, %15 : vector<32x128xf32>
    %cst_8 = arith.constant dense<0.000000e+00> : vector<128xf32>
    %17 = vector.multi_reduction <add>, %16, %cst_8 [0] : vector<32x128xf32> to vector<128xf32>
    %18 = vector.shape_cast %17 : vector<128xf32> to vector<1x128xf32>
    %c0_9 = arith.constant 0 : index
    %c0_10 = arith.constant 0 : index
    %19 = memref.load %arg5[%c0_9, %c0_10] : memref<1x1xf32, #tpu.memory_space<smem>>
    %20 = vector.broadcast %19 : f32 to vector<1x128xf32>
    %21 = arith.addf %18, %20 : vector<1x128xf32>
    %c0_11 = arith.constant 0 : index
    %c0_12 = arith.constant 0 : index
    %22 = vector.load %arg6[%c0_11, %c0_12] : memref<1x128xf32, #tpu.memory_space<vmem>>, vector<1x128xf32>
    tpu.vector_store %arg6[%c0_11, %c0_12], %21 {strides = array<i32>} : memref<1x128xf32, #tpu.memory_space<vmem>>, vector<1x128xf32>,
    return
  }
  func.func @transform_0(%arg0: i32) -> (i32, i32) {
    %c0_i32 = arith.constant 0 : i32
    %c0_i32_0 = arith.constant 0 : i32
    return %c0_i32, %arg0 : i32, i32
  }
  func.func @transform_1(%arg0: i32) -> (i32, i32) {
    %c0_i32 = arith.constant 0 : i32
    %c0_i32_0 = arith.constant 0 : i32
    return %c0_i32, %arg0 : i32, i32
  }
  func.func @transform_2(%arg0: i32) -> (i32, i32) {
    %c0_i32 = arith.constant 0 : i32
    %c0_i32_0 = arith.constant 0 : i32
    %c0_i32_1 = arith.constant 0 : i32
    return %c0_i32, %c0_i32_0 : i32, i32
  }
  func.func @transform_3(%arg0: i32) -> (i32, i32) {
    %c0_i32 = arith.constant 0 : i32
    %c0_i32_0 = arith.constant 0 : i32
    %c0_i32_1 = arith.constant 0 : i32
    return %c0_i32, %c0_i32_0 : i32, i32
  }
  func.func @transform_4(%arg0: i32) -> (i32, i32) {
    %c0_i32 = arith.constant 0 : i32
    %c0_i32_0 = arith.constant 0 : i32
    %c0_i32_1 = arith.constant 0 : i32
    return %c0_i32, %c0_i32_0 : i32, i32
  }
  func.func @transform_5(%arg0: i32) -> (i32, i32) {
    %c0_i32 = arith.constant 0 : i32
    %c0_i32_0 = arith.constant 0 : i32
    return %c0_i32, %arg0 : i32, i32
  }
}

</mosaic_0001>

<llo_original>
// kernel: tpu_custom_call.1
$region0: #{tpu_custom_call.1}
  #allocation0 [shape = 'u32[]', space=smem, size = 0x4, offset = 0x4, fixed_abs, tag = 'smem constant byte address 0x4 - core index']
  #allocation1 [shape = 'u32[144,128]{1,0:T(1,128)}', space=vmem, size = 0x12000, scoped, tag = 'internal scratch']
  #allocation2 [shape = 'f32[1,1]{1,0:T(1,128)S(6)}', space=smem, size = 0x200, scoped, tag = 'scoped memory for tpu_custom_call.1']
  %s0 = inlined_call_operand.vmem [shape: s32[1,128], index: 0, kind: input, shape index: {}]
  %s1 = inlined_call_operand.vmem [shape: s32[1,128], index: 1, kind: input, shape index: {}]
  %s2 = inlined_call_operand.vmem [shape: f32[32,16], index: 2, kind: input, shape index: {}]
  %s3 = inlined_call_operand.vmem [shape: f32[32,24], index: 3, kind: input, shape index: {}]
  %s4 = inlined_call_operand.<no memory space> [shape: f32[1,1], index: 4, kind: input, shape index: {}]
  %s5 = inlined_call_operand.hbm [shape: f32[1,128], index: 5, kind: output, shape index: {}]
  %s6 = sld [smem:[#allocation0]]
  $region30: #{tpu_custom_call.1} parent=0
    _
  %s8 = ssub.s32 1, %s6
  %s9 = scalar_select 0, %s8, %s6
  %10 = sst [smem:[#allocation2]] %s4
  $region1: #{tpu_custom_call.1} parent=0
    #allocation3 [shape = 'u8[512]{0}', space=vmem, size = 0x400, scoped, tag = 'output window, operand 0, single buffered']
    #allocation4 [shape = 's32[1]{0}', space=sflag, size = 0x4, scoped, tag = 'scoped memory for tpu_custom_call.1']
    %11 = vsyncpa [#allocation4], 0
    // Predicated region
    $region2: #{tpu_custom_call.1} parent=1 // pred_check
      _
    $region3: #{tpu_custom_call.1} parent=1 // pred_check_branch
      %13 = sbr.rel (0) target = $region5
    $region4: #{tpu_custom_call.1} parent=1 // pred_region
      _
    $region5: #{tpu_custom_call.1} parent=1 // pred_fallthru
      _
    // Predicated region
    $region6: #{tpu_custom_call.1} parent=1 // pred_check
      _
    $region7: #{tpu_custom_call.1} parent=1 // pred_check_branch
      %15 = sbr.rel (0) target = $region9
    $region8: #{tpu_custom_call.1} parent=1 // pred_region
      _
    $region9: #{tpu_custom_call.1} parent=1 // pred_fallthru
      _
    // Predicated region
    $region10: #{tpu_custom_call.1} parent=1 // pred_check
      _
    $region11: #{tpu_custom_call.1} parent=1 // pred_check_branch
      %17 = sbr.rel (0) target = $region13
    $region12: #{tpu_custom_call.1} parent=1 // pred_region
      _
    $region13: #{tpu_custom_call.1} parent=1 // pred_fallthru
      _
    // Predicated region
    $region14: #{tpu_custom_call.1} parent=1 // pred_check
      _
    $region15: #{tpu_custom_call.1} parent=1 // pred_check_branch
      %19 = sbr.rel (0) target = $region17
    $region16: #{tpu_custom_call.1} parent=1 // pred_region
      _
    $region17: #{tpu_custom_call.1} parent=1 // pred_fallthru
      _
    // Predicated region
    $region18: #{tpu_custom_call.1} parent=1 // pred_check
      _
    $region19: #{tpu_custom_call.1} parent=1 // pred_check_branch
      %21 = sbr.rel (0) target = $region21
    $region20: #{tpu_custom_call.1} parent=1 // pred_region
      _
    $region21: #{tpu_custom_call.1} parent=1 // pred_fallthru
      _
    %v22 = vld [vmem:[%s0] sm:$0x1]
    %v23 = vld [vmem:[%s1] sm:$0x1]
    %v24 = vlaneseq
    %v25 = vshrl.u32 %v24, 7
    %v26 = vadd.s32 %v25, 8
    %v27 = vadd.s32 %v25, 16
    %v28 = vlaneseq
    %v29 = vshrl.u32 %v28, 7
    %v30 = vsub.s32 0, %v29
    %v31 = vrot.slane %v22, %v30
    %vm32 = vcmp.eq.s32.totalorder %v25, %v31
    %vm33 = vcmp.eq.s32.totalorder %v26, %v31
    %v34 = vsel %vm32, 1, 0
    %v35 = vsel %vm33, 1, 0
    %v36 = vcvt.s32.f32 %v34
    %v37 = vcvt.s32.f32 %v35
    %v38 = vlaneseq
    %v39 = vshrl.u32 %v38, 7
    %v40 = vsub.s32 0, %v39
    %v41 = vrot.slane %v23, %v40
    %vm42 = vcmp.eq.s32.totalorder %v25, %v41
    %vm43 = vcmp.eq.s32.totalorder %v26, %v41
    %vm44 = vcmp.eq.s32.totalorder %v27, %v41
    %v45 = vsel %vm42, 1, 0
    %v46 = vsel %vm43, 1, 0
    %v47 = vsel %vm44, 1, 0
    %v48 = vcvt.s32.f32 %v45
    %v49 = vcvt.s32.f32 %v46
    %v50 = vcvt.s32.f32 %v47
    %v51 = vld [vmem:[%s2] sm:$0xff]
    %v52 = vld [vmem:[%s2 + $0x8] sm:$0xff]
    %v53 = vld [vmem:[%s2 + $0x10] sm:$0xff]
    %v54 = vld [vmem:[%s2 + $0x18] sm:$0xff]
    %vm55 = vcmask 130048
    %v57 = vsel %vm55, %v51, 0
    %v60 = vsel %vm55, %v52, 0
    %v63 = vsel %vm55, %v53, 0
    %v66 = vsel %vm55, %v54, 0
    %68 = vmatprep.subr.mxu0 0.0
    %69 = vmatpush1.msra.mxu0 0.0
    %70 = vmatprep.subr.mxu0 0.0
    %71 = vmatpush1.msra.mxu0 0.0
    %72 = vmatprep.subr.mxu0 0.0
    %73 = vmatpush1.msra.mxu0 0.0
    %74 = vmatprep.subr.mxu0 0.0
    %75 = vmatpush1.msra.mxu0 0.0
    %76 = vmatprep.subr.mxu0 0.0
    %77 = vmatpush1.msra.mxu0 0.0
    %78 = vmatprep.subr.mxu0 0.0
    %79 = vmatpush1.msra.mxu0 0.0
    %80 = vmatprep.subr.mxu0 0.0
    %81 = vmatpush1.msra.mxu0 0.0
    %82 = vmatprep.subr.mxu0 0.0
    %83 = vmatpush1.msra.mxu0 0.0
    %84 = vmatprep.subr.mxu0 0.0
    %85 = vmatpush1.msra.mxu0 0.0
    %86 = vmatprep.subr.mxu0 0.0
    %87 = vmatpush1.msra.mxu0 0.0
    %88 = vmatprep.subr.mxu0 0.0
    %89 = vmatpush1.msra.mxu0 0.0
    %90 = vmatprep.subr.mxu0 0.0
    %91 = vmatpush1.msra.mxu0 0.0
    %92 = vmatprep.subr.mxu0 0.0
    %93 = vmatpush1.msra.mxu0 0.0
    %94 = vmatprep.subr.mxu0 0.0
    %95 = vmatpush1.msra.mxu0 0.0
    %96 = vmatprep.subr.mxu0 0.0
    %v97 = vand.u32 %v37, 4294901760
    %98 = vmatpush1.msra.mxu0 %v97
    %99 = vmatprep.subr.mxu0 0.0
    %v100 = vand.u32 %v36, 4294901760
    %101 = vmatpush1.msra.mxu0 %v100
    %102 = vmatprep.subr.mxu0 0.0
    %103 = vmatpush2.msra.mxu0 0.0
    %104 = vmatprep.subr.mxu0 0.0
    %105 = vmatpush2.msra.mxu0 0.0
    %106 = vmatprep.subr.mxu0 0.0
    %107 = vmatpush2.msra.mxu0 0.0
    %108 = vmatprep.subr.mxu0 0.0
    %109 = vmatpush2.msra.mxu0 0.0
    %110 = vmatprep.subr.mxu0 0.0
    %111 = vmatpush2.msra.mxu0 0.0
    %112 = vmatprep.subr.mxu0 0.0
    %113 = vmatpush2.msra.mxu0 0.0
    %114 = vmatprep.subr.mxu0 0.0
    %115 = vmatpush2.msra.mxu0 0.0
    %116 = vmatprep.subr.mxu0 0.0
    %117 = vmatpush2.msra.mxu0 0.0
    %118 = vmatprep.subr.mxu0 0.0
    %119 = vmatpush2.msra.mxu0 0.0
    %120 = vmatprep.subr.mxu0 0.0
    %121 = vmatpush2.msra.mxu0 0.0
    %122 = vmatprep.subr.mxu0 0.0
    %123 = vmatpush2.msra.mxu0 0.0
    %124 = vmatprep.subr.mxu0 0.0
    %125 = vmatpush2.msra.mxu0 0.0
    %126 = vmatprep.subr.mxu0 0.0
    %127 = vmatpush2.msra.mxu0 0.0
    %128 = vmatprep.subr.mxu0 0.0
    %129 = vmatpush2.msra.mxu0 0.0
    %130 = vmatprep.subr.mxu0 0.0
    %131 = vmatpush2.msra.mxu0 0.0
    %132 = vmatprep.subr.mxu0 0.0
    %133 = vmatpush2.msra.mxu0 0.0
    %134 = vmatprep.mubr.f32.mxu0 0.0
    %v135 = vand.u32 %v57, 4294901760
    %v136 = vsub.f32 %v57, %v135
    %v137 = vand.u32 %v136, 4294901760
    %v138 = vsub.f32 %v136, %v137
    %v139 = vand.u32 %v138, 4294901760
    %140 = vmatmul.mubr.f32.gmra.mxu0 %v139
    %v141 = vpop.f32.mrf.mxu0
    %v142 = vadd.f32 0.0, %v141
    %v143 = vpop.f32.mrf.mxu0
    %144 = vmatprep.mubr.f32.mxu0 0.0
    %v145 = vand.u32 %v60, 4294901760
    %v146 = vsub.f32 %v60, %v145
    %v147 = vand.u32 %v146, 4294901760
    %v148 = vsub.f32 %v146, %v147
    %v149 = vand.u32 %v148, 4294901760
    %150 = vmatmul.mubr.f32.gmra.mxu0 %v149
    %v151 = vpop.f32.mrf.mxu0
    %v152 = vadd.f32 0.0, %v151
    %v153 = vpop.f32.mrf.mxu0
    %154 = vmatprep.mubr.f32.mxu0 0.0
    %v155 = vand.u32 %v63, 4294901760
    %v156 = vsub.f32 %v63, %v155
    %v157 = vand.u32 %v156, 4294901760
    %v158 = vsub.f32 %v156, %v157
    %v159 = vand.u32 %v158, 4294901760
    %160 = vmatmul.mubr.f32.gmra.mxu0 %v159
    %v161 = vpop.f32.mrf.mxu0
    %v162 = vadd.f32 0.0, %v161
    %v163 = vpop.f32.mrf.mxu0
    %164 = vmatprep.mubr.f32.mxu0 0.0
    %v165 = vand.u32 %v66, 4294901760
    %v166 = vsub.f32 %v66, %v165
    %v167 = vand.u32 %v166, 4294901760
    %v168 = vsub.f32 %v166, %v167
    %v169 = vand.u32 %v168, 4294901760
    %170 = vmatmul.mubr.f32.gmra.mxu0 %v169
    %v171 = vpop.f32.mrf.mxu0
    %v172 = vadd.f32 0.0, %v171
    %v173 = vpop.f32.mrf.mxu0
    %174 = vdwg.mxu0
    %175 = vmatprep.subr.mxu0 0.0
    %176 = vmatpush1.msra.mxu0 0.0
    %177 = vmatprep.subr.mxu0 0.0
    %178 = vmatpush1.msra.mxu0 0.0
    %179 = vmatprep.subr.mxu0 0.0
    %180 = vmatpush1.msra.mxu0 0.0
    %181 = vmatprep.subr.mxu0 0.0
    %182 = vmatpush1.msra.mxu0 0.0
    %183 = vmatprep.subr.mxu0 0.0
    %184 = vmatpush1.msra.mxu0 0.0
    %185 = vmatprep.subr.mxu0 0.0
    %186 = vmatpush1.msra.mxu0 0.0
    %187 = vmatprep.subr.mxu0 0.0
    %188 = vmatpush1.msra.mxu0 0.0
    %189 = vmatprep.subr.mxu0 0.0
    %190 = vmatpush1.msra.mxu0 0.0
    %191 = vmatprep.subr.mxu0 0.0
    %192 = vmatpush1.msra.mxu0 0.0
    %193 = vmatprep.subr.mxu0 0.0
    %194 = vmatpush1.msra.mxu0 0.0
    %195 = vmatprep.subr.mxu0 0.0
    %196 = vmatpush1.msra.mxu0 0.0
    %197 = vmatprep.subr.mxu0 0.0
    %198 = vmatpush1.msra.mxu0 0.0
    %199 = vmatprep.subr.mxu0 0.0
    %200 = vmatpush1.msra.mxu0 0.0
    %201 = vmatprep.subr.mxu0 0.0
    %202 = vmatpush1.msra.mxu0 0.0
    %203 = vmatprep.subr.mxu0 0.0
    %v204 = vand.u32 %v37, 4294901760
    %v205 = vsub.f32 %v37, %v204
    %v206 = vand.u32 %v205, 4294901760
    %v207 = vsub.f32 %v205, %v206
    %v208 = vand.u32 %v207, 4294901760
    %209 = vmatpush1.msra.mxu0 %v208
    %210 = vmatprep.subr.mxu0 0.0
    %v211 = vand.u32 %v36, 4294901760
    %v212 = vsub.f32 %v36, %v211
    %v213 = vand.u32 %v212, 4294901760
    %v214 = vsub.f32 %v212, %v213
    %v215 = vand.u32 %v214, 4294901760
    %216 = vmatpush1.msra.mxu0 %v215
    %217 = vmatprep.subr.mxu0 0.0
    %218 = vmatpush2.msra.mxu0 0.0
    %219 = vmatprep.subr.mxu0 0.0
    %220 = vmatpush2.msra.mxu0 0.0
    %221 = vmatprep.subr.mxu0 0.0
    %222 = vmatpush2.msra.mxu0 0.0
    %223 = vmatprep.subr.mxu0 0.0
    %224 = vmatpush2.msra.mxu0 0.0
    %225 = vmatprep.subr.mxu0 0.0
    %226 = vmatpush2.msra.mxu0 0.0
    %227 = vmatprep.subr.mxu0 0.0
    %228 = vmatpush2.msra.mxu0 0.0
    %229 = vmatprep.subr.mxu0 0.0
    %230 = vmatpush2.msra.mxu0 0.0
    %231 = vmatprep.subr.mxu0 0.0
    %232 = vmatpush2.msra.mxu0 0.0
    %233 = vmatprep.subr.mxu0 0.0
    %234 = vmatpush2.msra.mxu0 0.0
    %235 = vmatprep.subr.mxu0 0.0
    %236 = vmatpush2.msra.mxu0 0.0
    %237 = vmatprep.subr.mxu0 0.0
    %238 = vmatpush2.msra.mxu0 0.0
    %239 = vmatprep.subr.mxu0 0.0
    %240 = vmatpush2.msra.mxu0 0.0
    %241 = vmatprep.subr.mxu0 0.0
    %242 = vmatpush2.msra.mxu0 0.0
    %243 = vmatprep.subr.mxu0 0.0
    %244 = vmatpush2.msra.mxu0 0.0
    %245 = vmatprep.subr.mxu0 0.0
    %246 = vmatpush2.msra.mxu0 0.0
    %247 = vmatprep.subr.mxu0 0.0
    %248 = vmatpush2.msra.mxu0 0.0
    %249 = vmatprep.mubr.f32.mxu0 0.0
    %v250 = vand.u32 %v57, 4294901760
    %251 = vmatmul.mubr.f32.gmra.mxu0 %v250
    %v252 = vpop.f32.mrf.mxu0
    %v253 = vadd.f32 %v142, %v252
    %v254 = vpop.f32.mrf.mxu0
    %255 = vmatprep.mubr.f32.mxu0 0.0
    %v256 = vand.u32 %v60, 4294901760
    %257 = vmatmul.mubr.f32.gmra.mxu0 %v256
    %v258 = vpop.f32.mrf.mxu0
    %v259 = vadd.f32 %v152, %v258
    %v260 = vpop.f32.mrf.mxu0
    %261 = vmatprep.mubr.f32.mxu0 0.0
    %v262 = vand.u32 %v63, 4294901760
    %263 = vmatmul.mubr.f32.gmra.mxu0 %v262
    %v264 = vpop.f32.mrf.mxu0
    %v265 = vadd.f32 %v162, %v264
    %v266 = vpop.f32.mrf.mxu0
    %267 = vmatprep.mubr.f32.mxu0 0.0
    %v268 = vand.u32 %v66, 4294901760
    %269 = vmatmul.mubr.f32.gmra.mxu0 %v268
    %v270 = vpop.f32.mrf.mxu0
    %v271 = vadd.f32 %v172, %v270
    %v272 = vpop.f32.mrf.mxu0
    %273 = vdwg.mxu0
    %274 = vmatprep.subr.mxu0 0.0
    %275 = vmatpush1.msra.mxu0 0.0
    %276 = vmatprep.subr.mxu0 0.0
    %277 = vmatpush1.msra.mxu0 0.0
    %278 = vmatprep.subr.mxu0 0.0
    %279 = vmatpush1.msra.mxu0 0.0
    %280 = vmatprep.subr.mxu0 0.0
    %281 = vmatpush1.msra.mxu0 0.0
    %282 = vmatprep.subr.mxu0 0.0
    %283 = vmatpush1.msra.mxu0 0.0
    %284 = vmatprep.subr.mxu0 0.0
    %285 = vmatpush1.msra.mxu0 0.0
    %286 = vmatprep.subr.mxu0 0.0
    %287 = vmatpush1.msra.mxu0 0.0
    %288 = vmatprep.subr.mxu0 0.0
    %289 = vmatpush1.msra.mxu0 0.0
    %290 = vmatprep.subr.mxu0 0.0
    %291 = vmatpush1.msra.mxu0 0.0
    %292 = vmatprep.subr.mxu0 0.0
    %293 = vmatpush1.msra.mxu0 0.0
    %294 = vmatprep.subr.mxu0 0.0
    %295 = vmatpush1.msra.mxu0 0.0
    %296 = vmatprep.subr.mxu0 0.0
    %297 = vmatpush1.msra.mxu0 0.0
    %298 = vmatprep.subr.mxu0 0.0
    %299 = vmatpush1.msra.mxu0 0.0
    %300 = vmatprep.subr.mxu0 0.0
    %301 = vmatpush1.msra.mxu0 0.0
    %302 = vmatprep.subr.mxu0 0.0
    %v303 = vand.u32 %v37, 4294901760
    %v304 = vsub.f32 %v37, %v303
    %305 = vmatpush1.msra.mxu0 %v304
    %306 = vmatprep.subr.mxu0 0.0
    %v307 = vand.u32 %v36, 4294901760
    %v308 = vsub.f32 %v36, %v307
    %309 = vmatpush1.msra.mxu0 %v308
    %310 = vmatprep.subr.mxu0 0.0
    %311 = vmatpush2.msra.mxu0 0.0
    %312 = vmatprep.subr.mxu0 0.0
    %313 = vmatpush2.msra.mxu0 0.0
    %314 = vmatprep.subr.mxu0 0.0
    %315 = vmatpush2.msra.mxu0 0.0
    %316 = vmatprep.subr.mxu0 0.0
    %317 = vmatpush2.msra.mxu0 0.0
    %318 = vmatprep.subr.mxu0 0.0
    %319 = vmatpush2.msra.mxu0 0.0
    %320 = vmatprep.subr.mxu0 0.0
    %321 = vmatpush2.msra.mxu0 0.0
    %322 = vmatprep.subr.mxu0 0.0
    %323 = vmatpush2.msra.mxu0 0.0
    %324 = vmatprep.subr.mxu0 0.0
    %325 = vmatpush2.msra.mxu0 0.0
    %326 = vmatprep.subr.mxu0 0.0
    %327 = vmatpush2.msra.mxu0 0.0
    %328 = vmatprep.subr.mxu0 0.0
    %329 = vmatpush2.msra.mxu0 0.0
    %330 = vmatprep.subr.mxu0 0.0
    %331 = vmatpush2.msra.mxu0 0.0
    %332 = vmatprep.subr.mxu0 0.0
    %333 = vmatpush2.msra.mxu0 0.0
    %334 = vmatprep.subr.mxu0 0.0
    %335 = vmatpush2.msra.mxu0 0.0
    %336 = vmatprep.subr.mxu0 0.0
    %337 = vmatpush2.msra.mxu0 0.0
    %338 = vmatprep.subr.mxu0 0.0
    %339 = vmatpush2.msra.mxu0 0.0
    %340 = vmatprep.subr.mxu0 0.0
    %341 = vmatpush2.msra.mxu0 0.0
    %342 = vmatprep.mubr.f32.mxu0 0.0
    %v343 = vand.u32 %v57, 4294901760
    %v344 = vsub.f32 %v57, %v343
    %345 = vmatmul.mubr.f32.gmra.mxu0 %v344
    %v346 = vpop.f32.mrf.mxu0
    %v347 = vadd.f32 %v253, %v346
    %v348 = vpop.f32.mrf.mxu0
    %349 = vmatprep.mubr.f32.mxu0 0.0
    %v350 = vand.u32 %v60, 4294901760
    %v351 = vsub.f32 %v60, %v350
    %352 = vmatmul.mubr.f32.gmra.mxu0 %v351
    %v353 = vpop.f32.mrf.mxu0
    %v354 = vadd.f32 %v259, %v353
    %v355 = vpop.f32.mrf.mxu0
    %356 = vmatprep.mubr.f32.mxu0 0.0
    %v357 = vand.u32 %v63, 4294901760
    %v358 = vsub.f32 %v63, %v357
    %359 = vmatmul.mubr.f32.gmra.mxu0 %v358
    %v360 = vpop.f32.mrf.mxu0
    %v361 = vadd.f32 %v265, %v360
    %v362 = vpop.f32.mrf.mxu0
    %363 = vmatprep.mubr.f32.mxu0 0.0
    %v364 = vand.u32 %v66, 4294901760
    %v365 = vsub.f32 %v66, %v364
    %366 = vmatmul.mubr.f32.gmra.mxu0 %v365
    %v367 = vpop.f32.mrf.mxu0
    %v368 = vadd.f32 %v271, %v367
    %v369 = vpop.f32.mrf.mxu0
    %370 = vdwg.mxu0
    %371 = vmatprep.subr.mxu0 0.0
    %372 = vmatpush1.msra.mxu0 0.0
    %373 = vmatprep.subr.mxu0 0.0
    %374 = vmatpush1.msra.mxu0 0.0
    %375 = vmatprep.subr.mxu0 0.0
    %376 = vmatpush1.msra.mxu0 0.0
    %377 = vmatprep.subr.mxu0 0.0
    %378 = vmatpush1.msra.mxu0 0.0
    %379 = vmatprep.subr.mxu0 0.0
    %380 = vmatpush1.msra.mxu0 0.0
    %381 = vmatprep.subr.mxu0 0.0
    %382 = vmatpush1.msra.mxu0 0.0
    %383 = vmatprep.subr.mxu0 0.0
    %384 = vmatpush1.msra.mxu0 0.0
    %385 = vmatprep.subr.mxu0 0.0
    %386 = vmatpush1.msra.mxu0 0.0
    %387 = vmatprep.subr.mxu0 0.0
    %388 = vmatpush1.msra.mxu0 0.0
    %389 = vmatprep.subr.mxu0 0.0
    %390 = vmatpush1.msra.mxu0 0.0
    %391 = vmatprep.subr.mxu0 0.0
    %392 = vmatpush1.msra.mxu0 0.0
    %393 = vmatprep.subr.mxu0 0.0
    %394 = vmatpush1.msra.mxu0 0.0
    %395 = vmatprep.subr.mxu0 0.0
    %396 = vmatpush1.msra.mxu0 0.0
    %397 = vmatprep.subr.mxu0 0.0
    %398 = vmatpush1.msra.mxu0 0.0
    %399 = vmatprep.subr.mxu0 0.0
    %v400 = vand.u32 %v37, 4294901760
    %401 = vmatpush1.msra.mxu0 %v400
    %402 = vmatprep.subr.mxu0 0.0
    %v403 = vand.u32 %v36, 4294901760
    %404 = vmatpush1.msra.mxu0 %v403
    %405 = vmatprep.subr.mxu0 0.0
    %406 = vmatpush2.msra.mxu0 0.0
    %407 = vmatprep.subr.mxu0 0.0
    %408 = vmatpush2.msra.mxu0 0.0
    %409 = vmatprep.subr.mxu0 0.0
    %410 = vmatpush2.msra.mxu0 0.0
    %411 = vmatprep.subr.mxu0 0.0
    %412 = vmatpush2.msra.mxu0 0.0
    %413 = vmatprep.subr.mxu0 0.0
    %414 = vmatpush2.msra.mxu0 0.0
    %415 = vmatprep.subr.mxu0 0.0
    %416 = vmatpush2.msra.mxu0 0.0
    %417 = vmatprep.subr.mxu0 0.0
    %418 = vmatpush2.msra.mxu0 0.0
    %419 = vmatprep.subr.mxu0 0.0
    %420 = vmatpush2.msra.mxu0 0.0
    %421 = vmatprep.subr.mxu0 0.0
    %422 = vmatpush2.msra.mxu0 0.0
    %423 = vmatprep.subr.mxu0 0.0
    %424 = vmatpush2.msra.mxu0 0.0
    %425 = vmatprep.subr.mxu0 0.0
    %426 = vmatpush2.msra.mxu0 0.0
    %427 = vmatprep.subr.mxu0 0.0
    %428 = vmatpush2.msra.mxu0 0.0
    %429 = vmatprep.subr.mxu0 0.0
    %430 = vmatpush2.msra.mxu0 0.0
    %431 = vmatprep.subr.mxu0 0.0
    %432 = vmatpush2.msra.mxu0 0.0
    %433 = vmatprep.subr.mxu0 0.0
    %434 = vmatpush2.msra.mxu0 0.0
    %435 = vmatprep.subr.mxu0 0.0
    %436 = vmatpush2.msra.mxu0 0.0
    %437 = vmatprep.mubr.f32.mxu0 0.0
    %v438 = vand.u32 %v57, 4294901760
    %v439 = vsub.f32 %v57, %v438
    %v440 = vand.u32 %v439, 4294901760
    %441 = vmatmul.mubr.f32.gmra.mxu0 %v440
    %v442 = vpop.f32.mrf.mxu0
    %v443 = vadd.f32 %v347, %v442
    %v444 = vpop.f32.mrf.mxu0
    %445 = vmatprep.mubr.f32.mxu0 0.0
    %v446 = vand.u32 %v60, 4294901760
    %v447 = vsub.f32 %v60, %v446
    %v448 = vand.u32 %v447, 4294901760
    %449 = vmatmul.mubr.f32.gmra.mxu0 %v448
    %v450 = vpop.f32.mrf.mxu0
    %v451 = vadd.f32 %v354, %v450
    %v452 = vpop.f32.mrf.mxu0
    %453 = vmatprep.mubr.f32.mxu0 0.0
    %v454 = vand.u32 %v63, 4294901760
    %v455 = vsub.f32 %v63, %v454
    %v456 = vand.u32 %v455, 4294901760
    %457 = vmatmul.mubr.f32.gmra.mxu0 %v456
    %v458 = vpop.f32.mrf.mxu0
    %v459 = vadd.f32 %v361, %v458
    %v460 = vpop.f32.mrf.mxu0
    %461 = vmatprep.mubr.f32.mxu0 0.0
    %v462 = vand.u32 %v66, 4294901760
    %v463 = vsub.f32 %v66, %v462
    %v464 = vand.u32 %v463, 4294901760
    %465 = vmatmul.mubr.f32.gmra.mxu0 %v464
    %v466 = vpop.f32.mrf.mxu0
    %v467 = vadd.f32 %v368, %v466
    %v468 = vpop.f32.mrf.mxu0
    %469 = vdwg.mxu0
    %470 = vmatprep.subr.mxu0 0.0
    %471 = vmatpush1.msra.mxu0 0.0
    %472 = vmatprep.subr.mxu0 0.0
    %473 = vmatpush1.msra.mxu0 0.0
    %474 = vmatprep.subr.mxu0 0.0
    %475 = vmatpush1.msra.mxu0 0.0
    %476 = vmatprep.subr.mxu0 0.0
    %477 = vmatpush1.msra.mxu0 0.0
    %478 = vmatprep.subr.mxu0 0.0
    %479 = vmatpush1.msra.mxu0 0.0
    %480 = vmatprep.subr.mxu0 0.0
    %481 = vmatpush1.msra.mxu0 0.0
    %482 = vmatprep.subr.mxu0 0.0
    %483 = vmatpush1.msra.mxu0 0.0
    %484 = vmatprep.subr.mxu0 0.0
    %485 = vmatpush1.msra.mxu0 0.0
    %486 = vmatprep.subr.mxu0 0.0
    %487 = vmatpush1.msra.mxu0 0.0
    %488 = vmatprep.subr.mxu0 0.0
    %489 = vmatpush1.msra.mxu0 0.0
    %490 = vmatprep.subr.mxu0 0.0
    %491 = vmatpush1.msra.mxu0 0.0
    %492 = vmatprep.subr.mxu0 0.0
    %493 = vmatpush1.msra.mxu0 0.0
    %494 = vmatprep.subr.mxu0 0.0
    %495 = vmatpush1.msra.mxu0 0.0
    %496 = vmatprep.subr.mxu0 0.0
    %497 = vmatpush1.msra.mxu0 0.0
    %498 = vmatprep.subr.mxu0 0.0
    %v499 = vand.u32 %v37, 4294901760
    %v500 = vsub.f32 %v37, %v499
    %v501 = vand.u32 %v500, 4294901760
    %502 = vmatpush1.msra.mxu0 %v501
    %503 = vmatprep.subr.mxu0 0.0
    %v504 = vand.u32 %v36, 4294901760
    %v505 = vsub.f32 %v36, %v504
    %v506 = vand.u32 %v505, 4294901760
    %507 = vmatpush1.msra.mxu0 %v506
    %508 = vmatprep.subr.mxu0 0.0
    %509 = vmatpush2.msra.mxu0 0.0
    %510 = vmatprep.subr.mxu0 0.0
    %511 = vmatpush2.msra.mxu0 0.0
    %512 = vmatprep.subr.mxu0 0.0
    %513 = vmatpush2.msra.mxu0 0.0
    %514 = vmatprep.subr.mxu0 0.0
    %515 = vmatpush2.msra.mxu0 0.0
    %516 = vmatprep.subr.mxu0 0.0
    %517 = vmatpush2.msra.mxu0 0.0
    %518 = vmatprep.subr.mxu0 0.0
    %519 = vmatpush2.msra.mxu0 0.0
    %520 = vmatprep.subr.mxu0 0.0
    %521 = vmatpush2.msra.mxu0 0.0
    %522 = vmatprep.subr.mxu0 0.0
    %523 = vmatpush2.msra.mxu0 0.0
    %524 = vmatprep.subr.mxu0 0.0
    %525 = vmatpush2.msra.mxu0 0.0
    %526 = vmatprep.subr.mxu0 0.0
    %527 = vmatpush2.msra.mxu0 0.0
    %528 = vmatprep.subr.mxu0 0.0
    %529 = vmatpush2.msra.mxu0 0.0
    %530 = vmatprep.subr.mxu0 0.0
    %531 = vmatpush2.msra.mxu0 0.0
    %532 = vmatprep.subr.mxu0 0.0
    %533 = vmatpush2.msra.mxu0 0.0
    %534 = vmatprep.subr.mxu0 0.0
    %535 = vmatpush2.msra.mxu0 0.0
    %536 = vmatprep.subr.mxu0 0.0
    %537 = vmatpush2.msra.mxu0 0.0
    %538 = vmatprep.subr.mxu0 0.0
    %539 = vmatpush2.msra.mxu0 0.0
    %540 = vmatprep.mubr.f32.mxu0 0.0
    %v541 = vand.u32 %v57, 4294901760
    %542 = vmatmul.mubr.f32.gmra.mxu0 %v541
    %v543 = vpop.f32.mrf.mxu0
    %v544 = vadd.f32 %v443, %v543
    %v545 = vpop.f32.mrf.mxu0
    %546 = vmatprep.mubr.f32.mxu0 0.0
    %v547 = vand.u32 %v60, 4294901760
    %548 = vmatmul.mubr.f32.gmra.mxu0 %v547
    %v549 = vpop.f32.mrf.mxu0
    %v550 = vadd.f32 %v451, %v549
    %v551 = vpop.f32.mrf.mxu0
    %552 = vmatprep.mubr.f32.mxu0 0.0
    %v553 = vand.u32 %v63, 4294901760
    %554 = vmatmul.mubr.f32.gmra.mxu0 %v553
    %v555 = vpop.f32.mrf.mxu0
    %v556 = vadd.f32 %v459, %v555
    %v557 = vpop.f32.mrf.mxu0
    %558 = vmatprep.mubr.f32.mxu0 0.0
    %v559 = vand.u32 %v66, 4294901760
    %560 = vmatmul.mubr.f32.gmra.mxu0 %v559
    %v561 = vpop.f32.mrf.mxu0
    %v562 = vadd.f32 %v467, %v561
    %v563 = vpop.f32.mrf.mxu0
    %564 = vdwg.mxu0
    %565 = vmatprep.subr.mxu0 0.0
    %566 = vmatpush1.msra.mxu0 0.0
    %567 = vmatprep.subr.mxu0 0.0
    %568 = vmatpush1.msra.mxu0 0.0
    %569 = vmatprep.subr.mxu0 0.0
    %570 = vmatpush1.msra.mxu0 0.0
    %571 = vmatprep.subr.mxu0 0.0
    %572 = vmatpush1.msra.mxu0 0.0
    %573 = vmatprep.subr.mxu0 0.0
    %574 = vmatpush1.msra.mxu0 0.0
    %575 = vmatprep.subr.mxu0 0.0
    %576 = vmatpush1.msra.mxu0 0.0
    %577 = vmatprep.subr.mxu0 0.0
    %578 = vmatpush1.msra.mxu0 0.0
    %579 = vmatprep.subr.mxu0 0.0
    %580 = vmatpush1.msra.mxu0 0.0
    %581 = vmatprep.subr.mxu0 0.0
    %582 = vmatpush1.msra.mxu0 0.0
    %583 = vmatprep.subr.mxu0 0.0
    %584 = vmatpush1.msra.mxu0 0.0
    %585 = vmatprep.subr.mxu0 0.0
    %586 = vmatpush1.msra.mxu0 0.0
    %587 = vmatprep.subr.mxu0 0.0
    %588 = vmatpush1.msra.mxu0 0.0
    %589 = vmatprep.subr.mxu0 0.0
    %590 = vmatpush1.msra.mxu0 0.0
    %591 = vmatprep.subr.mxu0 0.0
    %592 = vmatpush1.msra.mxu0 0.0
    %593 = vmatprep.subr.mxu0 0.0
    %v594 = vand.u32 %v37, 4294901760
    %595 = vmatpush1.msra.mxu0 %v594
    %596 = vmatprep.subr.mxu0 0.0
    %v597 = vand.u32 %v36, 4294901760
    %598 = vmatpush1.msra.mxu0 %v597
    %599 = vmatprep.subr.mxu0 0.0
    %600 = vmatpush2.msra.mxu0 0.0
    %601 = vmatprep.subr.mxu0 0.0
    %602 = vmatpush2.msra.mxu0 0.0
    %603 = vmatprep.subr.mxu0 0.0
    %604 = vmatpush2.msra.mxu0 0.0
    %605 = vmatprep.subr.mxu0 0.0
    %606 = vmatpush2.msra.mxu0 0.0
    %607 = vmatprep.subr.mxu0 0.0
    %608 = vmatpush2.msra.mxu0 0.0
    %609 = vmatprep.subr.mxu0 0.0
    %610 = vmatpush2.msra.mxu0 0.0
    %611 = vmatprep.subr.mxu0 0.0
    %612 = vmatpush2.msra.mxu0 0.0
    %613 = vmatprep.subr.mxu0 0.0
    %614 = vmatpush2.msra.mxu0 0.0
    %615 = vmatprep.subr.mxu0 0.0
    %616 = vmatpush2.msra.mxu0 0.0
    %617 = vmatprep.subr.mxu0 0.0
    %618 = vmatpush2.msra.mxu0 0.0
    %619 = vmatprep.subr.mxu0 0.0
    %620 = vmatpush2.msra.mxu0 0.0
    %621 = vmatprep.subr.mxu0 0.0
    %622 = vmatpush2.msra.mxu0 0.0
    %623 = vmatprep.subr.mxu0 0.0
    %624 = vmatpush2.msra.mxu0 0.0
    %625 = vmatprep.subr.mxu0 0.0
    %626 = vmatpush2.msra.mxu0 0.0
    %627 = vmatprep.subr.mxu0 0.0
    %628 = vmatpush2.msra.mxu0 0.0
    %629 = vmatprep.subr.mxu0 0.0
    %630 = vmatpush2.msra.mxu0 0.0
    %631 = vmatprep.mubr.f32.mxu0 0.0
    %v632 = vand.u32 %v57, 4294901760
    %633 = vmatmul.mubr.f32.gmra.mxu0 %v632
    %v634 = vpop.f32.mrf.mxu0
    %v635 = vadd.f32 %v544, %v634
    %v636 = vpop.f32.mrf.mxu0
    %637 = vmatprep.mubr.f32.mxu0 0.0
    %v638 = vand.u32 %v60, 4294901760
    %639 = vmatmul.mubr.f32.gmra.mxu0 %v638
    %v640 = vpop.f32.mrf.mxu0
    %v641 = vadd.f32 %v550, %v640
    %v642 = vpop.f32.mrf.mxu0
    %643 = vmatprep.mubr.f32.mxu0 0.0
    %v644 = vand.u32 %v63, 4294901760
    %645 = vmatmul.mubr.f32.gmra.mxu0 %v644
    %v646 = vpop.f32.mrf.mxu0
    %v647 = vadd.f32 %v556, %v646
    %v648 = vpop.f32.mrf.mxu0
    %649 = vmatprep.mubr.f32.mxu0 0.0
    %v650 = vand.u32 %v66, 4294901760
    %651 = vmatmul.mubr.f32.gmra.mxu0 %v650
    %v652 = vpop.f32.mrf.mxu0
    %v653 = vadd.f32 %v562, %v652
    %v654 = vpop.f32.mrf.mxu0
    %655 = vdwg.mxu0
    %v656 = vld [vmem:[%s3] sm:$0xff]
    %v657 = vld [vmem:[%s3 + $0x8] sm:$0xff]
    %v658 = vld [vmem:[%s3 + $0x10] sm:$0xff]
    %v659 = vld [vmem:[%s3 + $0x18] sm:$0xff]
    %vm660 = vcmask 195584
    %v662 = vsel %vm660, %v656, 0
    %v665 = vsel %vm660, %v657, 0
    %v668 = vsel %vm660, %v658, 0
    %v671 = vsel %vm660, %v659, 0
    %673 = vmatprep.subr.mxu0 0.0
    %674 = vmatpush1.msra.mxu0 0.0
    %675 = vmatprep.subr.mxu0 0.0
    %676 = vmatpush1.msra.mxu0 0.0
    %677 = vmatprep.subr.mxu0 0.0
    %678 = vmatpush1.msra.mxu0 0.0
    %679 = vmatprep.subr.mxu0 0.0
    %680 = vmatpush1.msra.mxu0 0.0
    %681 = vmatprep.subr.mxu0 0.0
    %682 = vmatpush1.msra.mxu0 0.0
    %683 = vmatprep.subr.mxu0 0.0
    %684 = vmatpush1.msra.mxu0 0.0
    %685 = vmatprep.subr.mxu0 0.0
    %686 = vmatpush1.msra.mxu0 0.0
    %687 = vmatprep.subr.mxu0 0.0
    %688 = vmatpush1.msra.mxu0 0.0
    %689 = vmatprep.subr.mxu0 0.0
    %690 = vmatpush1.msra.mxu0 0.0
    %691 = vmatprep.subr.mxu0 0.0
    %692 = vmatpush1.msra.mxu0 0.0
    %693 = vmatprep.subr.mxu0 0.0
    %694 = vmatpush1.msra.mxu0 0.0
    %695 = vmatprep.subr.mxu0 0.0
    %696 = vmatpush1.msra.mxu0 0.0
    %697 = vmatprep.subr.mxu0 0.0
    %698 = vmatpush1.msra.mxu0 0.0
    %699 = vmatprep.subr.mxu0 0.0
    %v700 = vand.u32 %v50, 4294901760
    %701 = vmatpush1.msra.mxu0 %v700
    %702 = vmatprep.subr.mxu0 0.0
    %v703 = vand.u32 %v49, 4294901760
    %704 = vmatpush1.msra.mxu0 %v703
    %705 = vmatprep.subr.mxu0 0.0
    %v706 = vand.u32 %v48, 4294901760
    %707 = vmatpush1.msra.mxu0 %v706
    %708 = vmatprep.subr.mxu0 0.0
    %709 = vmatpush2.msra.mxu0 0.0
    %710 = vmatprep.subr.mxu0 0.0
    %711 = vmatpush2.msra.mxu0 0.0
    %712 = vmatprep.subr.mxu0 0.0
    %713 = vmatpush2.msra.mxu0 0.0
    %714 = vmatprep.subr.mxu0 0.0
    %715 = vmatpush2.msra.mxu0 0.0
    %716 = vmatprep.subr.mxu0 0.0
    %717 = vmatpush2.msra.mxu0 0.0
    %718 = vmatprep.subr.mxu0 0.0
    %719 = vmatpush2.msra.mxu0 0.0
    %720 = vmatprep.subr.mxu0 0.0
    %721 = vmatpush2.msra.mxu0 0.0
    %722 = vmatprep.subr.mxu0 0.0
    %723 = vmatpush2.msra.mxu0 0.0
    %724 = vmatprep.subr.mxu0 0.0
    %725 = vmatpush2.msra.mxu0 0.0
    %726 = vmatprep.subr.mxu0 0.0
    %727 = vmatpush2.msra.mxu0 0.0
    %728 = vmatprep.subr.mxu0 0.0
    %729 = vmatpush2.msra.mxu0 0.0
    %730 = vmatprep.subr.mxu0 0.0
    %731 = vmatpush2.msra.mxu0 0.0
    %732 = vmatprep.subr.mxu0 0.0
    %733 = vmatpush2.msra.mxu0 0.0
    %734 = vmatprep.subr.mxu0 0.0
    %735 = vmatpush2.msra.mxu0 0.0
    %736 = vmatprep.subr.mxu0 0.0
    %737 = vmatpush2.msra.mxu0 0.0
    %738 = vmatprep.subr.mxu0 0.0
    %739 = vmatpush2.msra.mxu0 0.0
    %740 = vmatprep.mubr.f32.mxu0 0.0
    %v741 = vand.u32 %v662, 4294901760
    %v742 = vsub.f32 %v662, %v741
    %v743 = vand.u32 %v742, 4294901760
    %v744 = vsub.f32 %v742, %v743
    %v745 = vand.u32 %v744, 4294901760
    %746 = vmatmul.mubr.f32.gmra.mxu0 %v745
    %v747 = vpop.f32.mrf.mxu0
    %v748 = vadd.f32 0.0, %v747
    %v749 = vpop.f32.mrf.mxu0
    %750 = vmatprep.mubr.f32.mxu0 0.0
    %v751 = vand.u32 %v665, 4294901760
    %v752 = vsub.f32 %v665, %v751
    %v753 = vand.u32 %v752, 4294901760
    %v754 = vsub.f32 %v752, %v753
    %v755 = vand.u32 %v754, 4294901760
    %756 = vmatmul.mubr.f32.gmra.mxu0 %v755
    %v757 = vpop.f32.mrf.mxu0
    %v758 = vadd.f32 0.0, %v757
    %v759 = vpop.f32.mrf.mxu0
    %760 = vmatprep.mubr.f32.mxu0 0.0
    %v761 = vand.u32 %v668, 4294901760
    %v762 = vsub.f32 %v668, %v761
    %v763 = vand.u32 %v762, 4294901760
    %v764 = vsub.f32 %v762, %v763
    %v765 = vand.u32 %v764, 4294901760
    %766 = vmatmul.mubr.f32.gmra.mxu0 %v765
    %v767 = vpop.f32.mrf.mxu0
    %v768 = vadd.f32 0.0, %v767
    %v769 = vpop.f32.mrf.mxu0
    %770 = vmatprep.mubr.f32.mxu0 0.0
    %v771 = vand.u32 %v671, 4294901760
    %v772 = vsub.f32 %v671, %v771
    %v773 = vand.u32 %v772, 4294901760
    %v774 = vsub.f32 %v772, %v773
    %v775 = vand.u32 %v774, 4294901760
    %776 = vmatmul.mubr.f32.gmra.mxu0 %v775
    %v777 = vpop.f32.mrf.mxu0
    %v778 = vadd.f32 0.0, %v777
    %v779 = vpop.f32.mrf.mxu0
    %780 = vdwg.mxu0
    %781 = vmatprep.subr.mxu0 0.0
    %782 = vmatpush1.msra.mxu0 0.0
    %783 = vmatprep.subr.mxu0 0.0
    %784 = vmatpush1.msra.mxu0 0.0
    %785 = vmatprep.subr.mxu0 0.0
    %786 = vmatpush1.msra.mxu0 0.0
    %787 = vmatprep.subr.mxu0 0.0
    %788 = vmatpush1.msra.mxu0 0.0
    %789 = vmatprep.subr.mxu0 0.0
    %790 = vmatpush1.msra.mxu0 0.0
    %791 = vmatprep.subr.mxu0 0.0
    %792 = vmatpush1.msra.mxu0 0.0
    %793 = vmatprep.subr.mxu0 0.0
    %794 = vmatpush1.msra.mxu0 0.0
    %795 = vmatprep.subr.mxu0 0.0
    %796 = vmatpush1.msra.mxu0 0.0
    %797 = vmatprep.subr.mxu0 0.0
    %798 = vmatpush1.msra.mxu0 0.0
    %799 = vmatprep.subr.mxu0 0.0
    %800 = vmatpush1.msra.mxu0 0.0
    %801 = vmatprep.subr.mxu0 0.0
    %802 = vmatpush1.msra.mxu0 0.0
    %803 = vmatprep.subr.mxu0 0.0
    %804 = vmatpush1.msra.mxu0 0.0
    %805 = vmatprep.subr.mxu0 0.0
    %806 = vmatpush1.msra.mxu0 0.0
    %807 = vmatprep.subr.mxu0 0.0
    %v808 = vand.u32 %v50, 4294901760
    %v809 = vsub.f32 %v50, %v808
    %v810 = vand.u32 %v809, 4294901760
    %v811 = vsub.f32 %v809, %v810
    %v812 = vand.u32 %v811, 4294901760
    %813 = vmatpush1.msra.mxu0 %v812
    %814 = vmatprep.subr.mxu0 0.0
    %v815 = vand.u32 %v49, 4294901760
    %v816 = vsub.f32 %v49, %v815
    %v817 = vand.u32 %v816, 4294901760
    %v818 = vsub.f32 %v816, %v817
    %v819 = vand.u32 %v818, 4294901760
    %820 = vmatpush1.msra.mxu0 %v819
    %821 = vmatprep.subr.mxu0 0.0
    %v822 = vand.u32 %v48, 4294901760
    %v823 = vsub.f32 %v48, %v822
    %v824 = vand.u32 %v823, 4294901760
    %v825 = vsub.f32 %v823, %v824
    %v826 = vand.u32 %v825, 4294901760
    %827 = vmatpush1.msra.mxu0 %v826
    %828 = vmatprep.subr.mxu0 0.0
    %829 = vmatpush2.msra.mxu0 0.0
    %830 = vmatprep.subr.mxu0 0.0
    %831 = vmatpush2.msra.mxu0 0.0
    %832 = vmatprep.subr.mxu0 0.0
    %833 = vmatpush2.msra.mxu0 0.0
    %834 = vmatprep.subr.mxu0 0.0
    %835 = vmatpush2.msra.mxu0 0.0
    %836 = vmatprep.subr.mxu0 0.0
    %837 = vmatpush2.msra.mxu0 0.0
    %838 = vmatprep.subr.mxu0 0.0
    %839 = vmatpush2.msra.mxu0 0.0
    %840 = vmatprep.subr.mxu0 0.0
    %841 = vmatpush2.msra.mxu0 0.0
    %842 = vmatprep.subr.mxu0 0.0
    %843 = vmatpush2.msra.mxu0 0.0
    %844 = vmatprep.subr.mxu0 0.0
    %845 = vmatpush2.msra.mxu0 0.0
    %846 = vmatprep.subr.mxu0 0.0
    %847 = vmatpush2.msra.mxu0 0.0
    %848 = vmatprep.subr.mxu0 0.0
    %849 = vmatpush2.msra.mxu0 0.0
    %850 = vmatprep.subr.mxu0 0.0
    %851 = vmatpush2.msra.mxu0 0.0
    %852 = vmatprep.subr.mxu0 0.0
    %853 = vmatpush2.msra.mxu0 0.0
    %854 = vmatprep.subr.mxu0 0.0
    %855 = vmatpush2.msra.mxu0 0.0
    %856 = vmatprep.subr.mxu0 0.0
    %857 = vmatpush2.msra.mxu0 0.0
    %858 = vmatprep.subr.mxu0 0.0
    %859 = vmatpush2.msra.mxu0 0.0
    %860 = vmatprep.mubr.f32.mxu0 0.0
    %v861 = vand.u32 %v662, 4294901760
    %862 = vmatmul.mubr.f32.gmra.mxu0 %v861
    %v863 = vpop.f32.mrf.mxu0
    %v864 = vadd.f32 %v748, %v863
    %v865 = vpop.f32.mrf.mxu0
    %866 = vmatprep.mubr.f32.mxu0 0.0
    %v867 = vand.u32 %v665, 4294901760
    %868 = vmatmul.mubr.f32.gmra.mxu0 %v867
    %v869 = vpop.f32.mrf.mxu0
    %v870 = vadd.f32 %v758, %v869
    %v871 = vpop.f32.mrf.mxu0
    %872 = vmatprep.mubr.f32.mxu0 0.0
    %v873 = vand.u32 %v668, 4294901760
    %874 = vmatmul.mubr.f32.gmra.mxu0 %v873
    %v875 = vpop.f32.mrf.mxu0
    %v876 = vadd.f32 %v768, %v875
    %v877 = vpop.f32.mrf.mxu0
    %878 = vmatprep.mubr.f32.mxu0 0.0
    %v879 = vand.u32 %v671, 4294901760
    %880 = vmatmul.mubr.f32.gmra.mxu0 %v879
    %v881 = vpop.f32.mrf.mxu0
    %v882 = vadd.f32 %v778, %v881
    %v883 = vpop.f32.mrf.mxu0
    %884 = vdwg.mxu0
    %885 = vmatprep.subr.mxu0 0.0
    %886 = vmatpush1.msra.mxu0 0.0
    %887 = vmatprep.subr.mxu0 0.0
    %888 = vmatpush1.msra.mxu0 0.0
    %889 = vmatprep.subr.mxu0 0.0
    %890 = vmatpush1.msra.mxu0 0.0
    %891 = vmatprep.subr.mxu0 0.0
    %892 = vmatpush1.msra.mxu0 0.0
    %893 = vmatprep.subr.mxu0 0.0
    %894 = vmatpush1.msra.mxu0 0.0
    %895 = vmatprep.subr.mxu0 0.0
    %896 = vmatpush1.msra.mxu0 0.0
    %897 = vmatprep.subr.mxu0 0.0
    %898 = vmatpush1.msra.mxu0 0.0
    %899 = vmatprep.subr.mxu0 0.0
    %900 = vmatpush1.msra.mxu0 0.0
    %901 = vmatprep.subr.mxu0 0.0
    %902 = vmatpush1.msra.mxu0 0.0
    %903 = vmatprep.subr.mxu0 0.0
    %904 = vmatpush1.msra.mxu0 0.0
    %905 = vmatprep.subr.mxu0 0.0
    %906 = vmatpush1.msra.mxu0 0.0
    %907 = vmatprep.subr.mxu0 0.0
    %908 = vmatpush1.msra.mxu0 0.0
    %909 = vmatprep.subr.mxu0 0.0
    %910 = vmatpush1.msra.mxu0 0.0
    %911 = vmatprep.subr.mxu0 0.0
    %v912 = vand.u32 %v50, 4294901760
    %v913 = vsub.f32 %v50, %v912
    %914 = vmatpush1.msra.mxu0 %v913
    %915 = vmatprep.subr.mxu0 0.0
    %v916 = vand.u32 %v49, 4294901760
    %v917 = vsub.f32 %v49, %v916
    %918 = vmatpush1.msra.mxu0 %v917
    %919 = vmatprep.subr.mxu0 0.0
    %v920 = vand.u32 %v48, 4294901760
    %v921 = vsub.f32 %v48, %v920
    %922 = vmatpush1.msra.mxu0 %v921
    %923 = vmatprep.subr.mxu0 0.0
    %924 = vmatpush2.msra.mxu0 0.0
    %925 = vmatprep.subr.mxu0 0.0
    %926 = vmatpush2.msra.mxu0 0.0
    %927 = vmatprep.subr.mxu0 0.0
    %928 = vmatpush2.msra.mxu0 0.0
    %929 = vmatprep.subr.mxu0 0.0
    %930 = vmatpush2.msra.mxu0 0.0
    %931 = vmatprep.subr.mxu0 0.0
    %932 = vmatpush2.msra.mxu0 0.0
    %933 = vmatprep.subr.mxu0 0.0
    %934 = vmatpush2.msra.mxu0 0.0
    %935 = vmatprep.subr.mxu0 0.0
    %936 = vmatpush2.msra.mxu0 0.0
    %937 = vmatprep.subr.mxu0 0.0
    %938 = vmatpush2.msra.mxu0 0.0
    %939 = vmatprep.subr.mxu0 0.0
    %940 = vmatpush2.msra.mxu0 0.0
    %941 = vmatprep.subr.mxu0 0.0
    %942 = vmatpush2.msra.mxu0 0.0
    %943 = vmatprep.subr.mxu0 0.0
    %944 = vmatpush2.msra.mxu0 0.0
    %945 = vmatprep.subr.mxu0 0.0
    %946 = vmatpush2.msra.mxu0 0.0
    %947 = vmatprep.subr.mxu0 0.0
    %948 = vmatpush2.msra.mxu0 0.0
    %949 = vmatprep.subr.mxu0 0.0
    %950 = vmatpush2.msra.mxu0 0.0
    %951 = vmatprep.subr.mxu0 0.0
    %952 = vmatpush2.msra.mxu0 0.0
    %953 = vmatprep.subr.mxu0 0.0
    %954 = vmatpush2.msra.mxu0 0.0
    %955 = vmatprep.mubr.f32.mxu0 0.0
    %v956 = vand.u32 %v662, 4294901760
    %v957 = vsub.f32 %v662, %v956
    %958 = vmatmul.mubr.f32.gmra.mxu0 %v957
    %v959 = vpop.f32.mrf.mxu0
    %v960 = vadd.f32 %v864, %v959
    %v961 = vpop.f32.mrf.mxu0
    %962 = vmatprep.mubr.f32.mxu0 0.0
    %v963 = vand.u32 %v665, 4294901760
    %v964 = vsub.f32 %v665, %v963
    %965 = vmatmul.mubr.f32.gmra.mxu0 %v964
    %v966 = vpop.f32.mrf.mxu0
    %v967 = vadd.f32 %v870, %v966
    %v968 = vpop.f32.mrf.mxu0
    %969 = vmatprep.mubr.f32.mxu0 0.0
    %v970 = vand.u32 %v668, 4294901760
    %v971 = vsub.f32 %v668, %v970
    %972 = vmatmul.mubr.f32.gmra.mxu0 %v971
    %v973 = vpop.f32.mrf.mxu0
    %v974 = vadd.f32 %v876, %v973
    %v975 = vpop.f32.mrf.mxu0
    %976 = vmatprep.mubr.f32.mxu0 0.0
    %v977 = vand.u32 %v671, 4294901760
    %v978 = vsub.f32 %v671, %v977
    %979 = vmatmul.mubr.f32.gmra.mxu0 %v978
    %v980 = vpop.f32.mrf.mxu0
    %v981 = vadd.f32 %v882, %v980
    %v982 = vpop.f32.mrf.mxu0
    %983 = vdwg.mxu0
    %984 = vmatprep.subr.mxu0 0.0
    %985 = vmatpush1.msra.mxu0 0.0
    %986 = vmatprep.subr.mxu0 0.0
    %987 = vmatpush1.msra.mxu0 0.0
    %988 = vmatprep.subr.mxu0 0.0
    %989 = vmatpush1.msra.mxu0 0.0
    %990 = vmatprep.subr.mxu0 0.0
    %991 = vmatpush1.msra.mxu0 0.0
    %992 = vmatprep.subr.mxu0 0.0
    %993 = vmatpush1.msra.mxu0 0.0
    %994 = vmatprep.subr.mxu0 0.0
    %995 = vmatpush1.msra.mxu0 0.0
    %996 = vmatprep.subr.mxu0 0.0
    %997 = vmatpush1.msra.mxu0 0.0
    %998 = vmatprep.subr.mxu0 0.0
    %999 = vmatpush1.msra.mxu0 0.0
    %1000 = vmatprep.subr.mxu0 0.0
    %1001 = vmatpush1.msra.mxu0 0.0
    %1002 = vmatprep.subr.mxu0 0.0
    %1003 = vmatpush1.msra.mxu0 0.0
    %1004 = vmatprep.subr.mxu0 0.0
    %1005 = vmatpush1.msra.mxu0 0.0
    %1006 = vmatprep.subr.mxu0 0.0
    %1007 = vmatpush1.msra.mxu0 0.0
    %1008 = vmatprep.subr.mxu0 0.0
    %1009 = vmatpush1.msra.mxu0 0.0
    %1010 = vmatprep.subr.mxu0 0.0
    %v1011 = vand.u32 %v50, 4294901760
    %1012 = vmatpush1.msra.mxu0 %v1011
    %1013 = vmatprep.subr.mxu0 0.0
    %v1014 = vand.u32 %v49, 4294901760
    %1015 = vmatpush1.msra.mxu0 %v1014
    %1016 = vmatprep.subr.mxu0 0.0
    %v1017 = vand.u32 %v48, 4294901760
    %1018 = vmatpush1.msra.mxu0 %v1017
    %1019 = vmatprep.subr.mxu0 0.0
    %1020 = vmatpush2.msra.mxu0 0.0
    %1021 = vmatprep.subr.mxu0 0.0
    %1022 = vmatpush2.msra.mxu0 0.0
    %1023 = vmatprep.subr.mxu0 0.0
    %1024 = vmatpush2.msra.mxu0 0.0
    %1025 = vmatprep.subr.mxu0 0.0
    %1026 = vmatpush2.msra.mxu0 0.0
    %1027 = vmatprep.subr.mxu0 0.0
    %1028 = vmatpush2.msra.mxu0 0.0
    %1029 = vmatprep.subr.mxu0 0.0
    %1030 = vmatpush2.msra.mxu0 0.0
    %1031 = vmatprep.subr.mxu0 0.0
    %1032 = vmatpush2.msra.mxu0 0.0
    %1033 = vmatprep.subr.mxu0 0.0
    %1034 = vmatpush2.msra.mxu0 0.0
    %1035 = vmatprep.subr.mxu0 0.0
    %1036 = vmatpush2.msra.mxu0 0.0
    %1037 = vmatprep.subr.mxu0 0.0
    %1038 = vmatpush2.msra.mxu0 0.0
    %1039 = vmatprep.subr.mxu0 0.0
    %1040 = vmatpush2.msra.mxu0 0.0
    %1041 = vmatprep.subr.mxu0 0.0
    %1042 = vmatpush2.msra.mxu0 0.0
    %1043 = vmatprep.subr.mxu0 0.0
    %1044 = vmatpush2.msra.mxu0 0.0
    %1045 = vmatprep.subr.mxu0 0.0
    %1046 = vmatpush2.msra.mxu0 0.0
    %1047 = vmatprep.subr.mxu0 0.0
    %1048 = vmatpush2.msra.mxu0 0.0
    %1049 = vmatprep.subr.mxu0 0.0
    %1050 = vmatpush2.msra.mxu0 0.0
    %1051 = vmatprep.mubr.f32.mxu0 0.0
    %v1052 = vand.u32 %v662, 4294901760
    %v1053 = vsub.f32 %v662, %v1052
    %v1054 = vand.u32 %v1053, 4294901760
    %1055 = vmatmul.mubr.f32.gmra.mxu0 %v1054
    %v1056 = vpop.f32.mrf.mxu0
    %v1057 = vadd.f32 %v960, %v1056
    %v1058 = vpop.f32.mrf.mxu0
    %1059 = vmatprep.mubr.f32.mxu0 0.0
    %v1060 = vand.u32 %v665, 4294901760
    %v1061 = vsub.f32 %v665, %v1060
    %v1062 = vand.u32 %v1061, 4294901760
    %1063 = vmatmul.mubr.f32.gmra.mxu0 %v1062
    %v1064 = vpop.f32.mrf.mxu0
    %v1065 = vadd.f32 %v967, %v1064
    %v1066 = vpop.f32.mrf.mxu0
    %1067 = vmatprep.mubr.f32.mxu0 0.0
    %v1068 = vand.u32 %v668, 4294901760
    %v1069 = vsub.f32 %v668, %v1068
    %v1070 = vand.u32 %v1069, 4294901760
    %1071 = vmatmul.mubr.f32.gmra.mxu0 %v1070
    %v1072 = vpop.f32.mrf.mxu0
    %v1073 = vadd.f32 %v974, %v1072
    %v1074 = vpop.f32.mrf.mxu0
    %1075 = vmatprep.mubr.f32.mxu0 0.0
    %v1076 = vand.u32 %v671, 4294901760
    %v1077 = vsub.f32 %v671, %v1076
    %v1078 = vand.u32 %v1077, 4294901760
    %1079 = vmatmul.mubr.f32.gmra.mxu0 %v1078
    %v1080 = vpop.f32.mrf.mxu0
    %v1081 = vadd.f32 %v981, %v1080
    %v1082 = vpop.f32.mrf.mxu0
    %1083 = vdwg.mxu0
    %1084 = vmatprep.subr.mxu0 0.0
    %1085 = vmatpush1.msra.mxu0 0.0
    %1086 = vmatprep.subr.mxu0 0.0
    %1087 = vmatpush1.msra.mxu0 0.0
    %1088 = vmatprep.subr.mxu0 0.0
    %1089 = vmatpush1.msra.mxu0 0.0
    %1090 = vmatprep.subr.mxu0 0.0
    %1091 = vmatpush1.msra.mxu0 0.0
    %1092 = vmatprep.subr.mxu0 0.0
    %1093 = vmatpush1.msra.mxu0 0.0
    %1094 = vmatprep.subr.mxu0 0.0
    %1095 = vmatpush1.msra.mxu0 0.0
    %1096 = vmatprep.subr.mxu0 0.0
    %1097 = vmatpush1.msra.mxu0 0.0
    %1098 = vmatprep.subr.mxu0 0.0
    %1099 = vmatpush1.msra.mxu0 0.0
    %1100 = vmatprep.subr.mxu0 0.0
    %1101 = vmatpush1.msra.mxu0 0.0
    %1102 = vmatprep.subr.mxu0 0.0
    %1103 = vmatpush1.msra.mxu0 0.0
    %1104 = vmatprep.subr.mxu0 0.0
    %1105 = vmatpush1.msra.mxu0 0.0
    %1106 = vmatprep.subr.mxu0 0.0
    %1107 = vmatpush1.msra.mxu0 0.0
    %1108 = vmatprep.subr.mxu0 0.0
    %1109 = vmatpush1.msra.mxu0 0.0
    %1110 = vmatprep.subr.mxu0 0.0
    %v1111 = vand.u32 %v50, 4294901760
    %v1112 = vsub.f32 %v50, %v1111
    %v1113 = vand.u32 %v1112, 4294901760
    %1114 = vmatpush1.msra.mxu0 %v1113
    %1115 = vmatprep.subr.mxu0 0.0
    %v1116 = vand.u32 %v49, 4294901760
    %v1117 = vsub.f32 %v49, %v1116
    %v1118 = vand.u32 %v1117, 4294901760
    %1119 = vmatpush1.msra.mxu0 %v1118
    %1120 = vmatprep.subr.mxu0 0.0
    %v1121 = vand.u32 %v48, 4294901760
    %v1122 = vsub.f32 %v48, %v1121
    %v1123 = vand.u32 %v1122, 4294901760
    %1124 = vmatpush1.msra.mxu0 %v1123
    %1125 = vmatprep.subr.mxu0 0.0
    %1126 = vmatpush2.msra.mxu0 0.0
    %1127 = vmatprep.subr.mxu0 0.0
    %1128 = vmatpush2.msra.mxu0 0.0
    %1129 = vmatprep.subr.mxu0 0.0
    %1130 = vmatpush2.msra.mxu0 0.0
    %1131 = vmatprep.subr.mxu0 0.0
    %1132 = vmatpush2.msra.mxu0 0.0
    %1133 = vmatprep.subr.mxu0 0.0
    %1134 = vmatpush2.msra.mxu0 0.0
    %1135 = vmatprep.subr.mxu0 0.0
    %1136 = vmatpush2.msra.mxu0 0.0
    %1137 = vmatprep.subr.mxu0 0.0
    %1138 = vmatpush2.msra.mxu0 0.0
    %1139 = vmatprep.subr.mxu0 0.0
    %1140 = vmatpush2.msra.mxu0 0.0
    %1141 = vmatprep.subr.mxu0 0.0
    %1142 = vmatpush2.msra.mxu0 0.0
    %1143 = vmatprep.subr.mxu0 0.0
    %1144 = vmatpush2.msra.mxu0 0.0
    %1145 = vmatprep.subr.mxu0 0.0
    %1146 = vmatpush2.msra.mxu0 0.0
    %1147 = vmatprep.subr.mxu0 0.0
    %1148 = vmatpush2.msra.mxu0 0.0
    %1149 = vmatprep.subr.mxu0 0.0
    %1150 = vmatpush2.msra.mxu0 0.0
    %1151 = vmatprep.subr.mxu0 0.0
    %1152 = vmatpush2.msra.mxu0 0.0
    %1153 = vmatprep.subr.mxu0 0.0
    %1154 = vmatpush2.msra.mxu0 0.0
    %1155 = vmatprep.subr.mxu0 0.0
    %1156 = vmatpush2.msra.mxu0 0.0
    %1157 = vmatprep.mubr.f32.mxu0 0.0
    %v1158 = vand.u32 %v662, 4294901760
    %1159 = vmatmul.mubr.f32.gmra.mxu0 %v1158
    %v1160 = vpop.f32.mrf.mxu0
    %v1161 = vadd.f32 %v1057, %v1160
    %v1162 = vpop.f32.mrf.mxu0
    %1163 = vmatprep.mubr.f32.mxu0 0.0
    %v1164 = vand.u32 %v665, 4294901760
    %1165 = vmatmul.mubr.f32.gmra.mxu0 %v1164
    %v1166 = vpop.f32.mrf.mxu0
    %v1167 = vadd.f32 %v1065, %v1166
    %v1168 = vpop.f32.mrf.mxu0
    %1169 = vmatprep.mubr.f32.mxu0 0.0
    %v1170 = vand.u32 %v668, 4294901760
    %1171 = vmatmul.mubr.f32.gmra.mxu0 %v1170
    %v1172 = vpop.f32.mrf.mxu0
    %v1173 = vadd.f32 %v1073, %v1172
    %v1174 = vpop.f32.mrf.mxu0
    %1175 = vmatprep.mubr.f32.mxu0 0.0
    %v1176 = vand.u32 %v671, 4294901760
    %1177 = vmatmul.mubr.f32.gmra.mxu0 %v1176
    %v1178 = vpop.f32.mrf.mxu0
    %v1179 = vadd.f32 %v1081, %v1178
    %v1180 = vpop.f32.mrf.mxu0
    %1181 = vdwg.mxu0
    %1182 = vmatprep.subr.mxu0 0.0
    %1183 = vmatpush1.msra.mxu0 0.0
    %1184 = vmatprep.subr.mxu0 0.0
    %1185 = vmatpush1.msra.mxu0 0.0
    %1186 = vmatprep.subr.mxu0 0.0
    %1187 = vmatpush1.msra.mxu0 0.0
    %1188 = vmatprep.subr.mxu0 0.0
    %1189 = vmatpush1.msra.mxu0 0.0
    %1190 = vmatprep.subr.mxu0 0.0
    %1191 = vmatpush1.msra.mxu0 0.0
    %1192 = vmatprep.subr.mxu0 0.0
    %1193 = vmatpush1.msra.mxu0 0.0
    %1194 = vmatprep.subr.mxu0 0.0
    %1195 = vmatpush1.msra.mxu0 0.0
    %1196 = vmatprep.subr.mxu0 0.0
    %1197 = vmatpush1.msra.mxu0 0.0
    %1198 = vmatprep.subr.mxu0 0.0
    %1199 = vmatpush1.msra.mxu0 0.0
    %1200 = vmatprep.subr.mxu0 0.0
    %1201 = vmatpush1.msra.mxu0 0.0
    %1202 = vmatprep.subr.mxu0 0.0
    %1203 = vmatpush1.msra.mxu0 0.0
    %1204 = vmatprep.subr.mxu0 0.0
    %1205 = vmatpush1.msra.mxu0 0.0
    %1206 = vmatprep.subr.mxu0 0.0
    %1207 = vmatpush1.msra.mxu0 0.0
    %1208 = vmatprep.subr.mxu0 0.0
    %v1209 = vand.u32 %v50, 4294901760
    %1210 = vmatpush1.msra.mxu0 %v1209
    %1211 = vmatprep.subr.mxu0 0.0
    %v1212 = vand.u32 %v49, 4294901760
    %1213 = vmatpush1.msra.mxu0 %v1212
    %1214 = vmatprep.subr.mxu0 0.0
    %v1215 = vand.u32 %v48, 4294901760
    %1216 = vmatpush1.msra.mxu0 %v1215
    %1217 = vmatprep.subr.mxu0 0.0
    %1218 = vmatpush2.msra.mxu0 0.0
    %1219 = vmatprep.subr.mxu0 0.0
    %1220 = vmatpush2.msra.mxu0 0.0
    %1221 = vmatprep.subr.mxu0 0.0
    %1222 = vmatpush2.msra.mxu0 0.0
    %1223 = vmatprep.subr.mxu0 0.0
    %1224 = vmatpush2.msra.mxu0 0.0
    %1225 = vmatprep.subr.mxu0 0.0
    %1226 = vmatpush2.msra.mxu0 0.0
    %1227 = vmatprep.subr.mxu0 0.0
    %1228 = vmatpush2.msra.mxu0 0.0
    %1229 = vmatprep.subr.mxu0 0.0
    %1230 = vmatpush2.msra.mxu0 0.0
    %1231 = vmatprep.subr.mxu0 0.0
    %1232 = vmatpush2.msra.mxu0 0.0
    %1233 = vmatprep.subr.mxu0 0.0
    %1234 = vmatpush2.msra.mxu0 0.0
    %1235 = vmatprep.subr.mxu0 0.0
    %1236 = vmatpush2.msra.mxu0 0.0
    %1237 = vmatprep.subr.mxu0 0.0
    %1238 = vmatpush2.msra.mxu0 0.0
    %1239 = vmatprep.subr.mxu0 0.0
    %1240 = vmatpush2.msra.mxu0 0.0
    %1241 = vmatprep.subr.mxu0 0.0
    %1242 = vmatpush2.msra.mxu0 0.0
    %1243 = vmatprep.subr.mxu0 0.0
    %1244 = vmatpush2.msra.mxu0 0.0
    %1245 = vmatprep.subr.mxu0 0.0
    %1246 = vmatpush2.msra.mxu0 0.0
    %1247 = vmatprep.subr.mxu0 0.0
    %1248 = vmatpush2.msra.mxu0 0.0
    %1249 = vmatprep.mubr.f32.mxu0 0.0
    %v1250 = vand.u32 %v662, 4294901760
    %1251 = vmatmul.mubr.f32.gmra.mxu0 %v1250
    %v1252 = vpop.f32.mrf.mxu0
    %v1253 = vadd.f32 %v1161, %v1252
    %v1254 = vpop.f32.mrf.mxu0
    %1255 = vmatprep.mubr.f32.mxu0 0.0
    %v1256 = vand.u32 %v665, 4294901760
    %1257 = vmatmul.mubr.f32.gmra.mxu0 %v1256
    %v1258 = vpop.f32.mrf.mxu0
    %v1259 = vadd.f32 %v1167, %v1258
    %v1260 = vpop.f32.mrf.mxu0
    %1261 = vmatprep.mubr.f32.mxu0 0.0
    %v1262 = vand.u32 %v668, 4294901760
    %1263 = vmatmul.mubr.f32.gmra.mxu0 %v1262
    %v1264 = vpop.f32.mrf.mxu0
    %v1265 = vadd.f32 %v1173, %v1264
    %v1266 = vpop.f32.mrf.mxu0
    %1267 = vmatprep.mubr.f32.mxu0 0.0
    %v1268 = vand.u32 %v671, 4294901760
    %1269 = vmatmul.mubr.f32.gmra.mxu0 %v1268
    %v1270 = vpop.f32.mrf.mxu0
    %v1271 = vadd.f32 %v1179, %v1270
    %v1272 = vpop.f32.mrf.mxu0
    %1273 = vdwg.mxu0
    %v1274 = vmul.f32 %v635, %v1253
    %v1275 = vmul.f32 %v641, %v1259
    %v1276 = vmul.f32 %v647, %v1265
    %v1277 = vmul.f32 %v653, %v1271
    %v1278 = vadd.f32 %v1274, %v1275
    %v1279 = vadd.f32 %v1278, %v1276
    %v1280 = vadd.f32 %v1279, %v1277
    %v1281 = vrot.slane %v1280, 4
    %v1282 = vadd.f32 %v1280, %v1281
    %v1283 = vrot.slane %v1282, 2
    %v1284 = vadd.f32 %v1282, %v1283
    %v1285 = vrot.slane %v1284, 1
    %v1286 = vadd.f32 %v1284, %v1285
    %s1287 = sld [smem:[#allocation2]]
    %v1288 = vstv %s1287
    %v1289 = vadd.f32 %v1286, %v1288
    %1290 = vst [vmem:[#allocation3] sm:$0x1] %v1289
    // Predicated region
    $region22: #{tpu_custom_call.1} parent=1 // pred_check
      _
    $region23: #{tpu_custom_call.1} parent=1 // pred_check_branch
      %1292 = sbr.rel (0) target = $region25
    $region24: #{tpu_custom_call.1} parent=1 // pred_region
      %s1294 = ssub.s32 16, 16
      %1295 = vsyncadd [#allocation4], %s1294
      %s1297 = sshll.u32 [#allocation3], 4
      %s1298 = int_to_ptr.vmem [resolvable:$true] %s1297
      %1300 = dma.vmem_to_hbm [thread:$0]  %s1298, 16, %s5, [#allocation4]
    $region25: #{tpu_custom_call.1} parent=1 // pred_fallthru
      _
    // Predicated region
    $region26: #{tpu_custom_call.1} parent=1 // pred_check
      _
    $region27: #{tpu_custom_call.1} parent=1 // pred_check_branch
      %1302 = sbr.rel (0) target = $region29
    $region28: #{tpu_custom_call.1} parent=1 // pred_region
      %1303 = dma.done [#allocation4], 16
    $region29: #{tpu_custom_call.1} parent=1 // pred_fallthru
      _
    %1304 = vsyncpa [#allocation4], 1

</llo_original>
